<compile_context>
chip_gen: v5e
topology: v5e:2x2
jax: 0.10.0
libtpu: 0.0.40
codegen_flags: <defaults>
</compile_context>

<pallas_src>
import jax
import jax.numpy as jnp
from jax.experimental import pallas as pl
from jax.experimental.pallas import tpu as pltpu

# Model dims (small, synthetic "BERT-like" MLM)
S = 8          # sequence length
D = 32         # hidden size
F = 64         # FFN inner size
V = 512        # vocab size (multiple of 128 -> lane-dense LM-head output)
MASK_ID = V - 1
MASK_POS = 3   # where the [MASK] token sits in the input ids


# ----------------------------------------------------------------------------
# Single fused kernel: encoder layer (fused-QKV attention + FFN + 2x LayerNorm)
# followed by the LM head restricted to the [MASK] position.
# ----------------------------------------------------------------------------
def fused_mlm_kernel(mask_idx_ref,                       # SMEM scalar
                     x_ref, wqkv_ref, wo_ref, bo_ref,
                     g1_ref, be1_ref, w1_ref, b1_ref, w2_ref, b2_ref,
                     g2_ref, be2_ref, wv_ref, bv_ref,
                     out_ref):
    x = x_ref[...]                                                   # [S, D]

    # --- single-head self-attention, fused QKV projection ---
    # One [S,D] x [D,3D] MXU push instead of three narrow [D,D] pushes.
    qkv = jnp.dot(x, wqkv_ref[...], preferred_element_type=jnp.float32)  # [S, 3D]
    q = qkv[:, 0 * D:1 * D]
    k = qkv[:, 1 * D:2 * D]
    v = qkv[:, 2 * D:3 * D]

    scores = jnp.dot(q, k.T, preferred_element_type=jnp.float32)
    scores = scores * (1.0 / jnp.sqrt(jnp.float32(D)))               # [S, S]

    m = jnp.max(scores, axis=-1, keepdims=True)
    p = jnp.exp(scores - m)
    # Reciprocal on the EUP slot instead of a VPU divide.
    p = p * pl.reciprocal(jnp.sum(p, axis=-1, keepdims=True), approx=True)

    attn = jnp.dot(p, v, preferred_element_type=jnp.float32)         # [S, D]
    attn = jnp.dot(attn, wo_ref[...],
                   preferred_element_type=jnp.float32) + bo_ref[...]

    # --- residual + LayerNorm 1 ---
    h = x + attn
    mu = jnp.mean(h, axis=-1, keepdims=True)
    var = jnp.mean((h - mu) ** 2, axis=-1, keepdims=True)
    h = (h - mu) * jax.lax.rsqrt(var + 1e-5) * g1_ref[...] + be1_ref[...]

    # --- FFN (GELU, tanh approximation) ---
    f = jnp.dot(h, w1_ref[...], preferred_element_type=jnp.float32) + b1_ref[...]
    f = 0.5 * f * (1.0 + jnp.tanh(0.7978845608028654 * (f + 0.044715 * f * f * f)))
    f = jnp.dot(f, w2_ref[...], preferred_element_type=jnp.float32) + b2_ref[...]

    # --- residual + LayerNorm 2 ---
    h2 = h + f
    mu2 = jnp.mean(h2, axis=-1, keepdims=True)
    var2 = jnp.mean((h2 - mu2) ** 2, axis=-1, keepdims=True)
    h2 = (h2 - mu2) * jax.lax.rsqrt(var2 + 1e-5) * g2_ref[...] + be2_ref[...]

    # --- select the [MASK] row (clamped index, no dynamic sublane slice) ---
    idx = jnp.minimum(jnp.maximum(mask_idx_ref[0], 0), S - 1)
    sel = jax.lax.broadcasted_iota(jnp.int32, (S, 1), 0) == idx
    row = jnp.sum(jnp.where(sel, h2, 0.0), axis=0, keepdims=True)    # [1, D]

    # --- LM head: single lane-dense [1, V] output, one unmasked store ---
    out_ref[...] = jnp.dot(row, wv_ref[...],
                           preferred_element_type=jnp.float32) + bv_ref[...]


def mlm_forward_at_mask(x, p, mask_idx):
    vmem = pl.BlockSpec(memory_space=pltpu.MemorySpace.VMEM)   # full-array blocks
    smem = pl.BlockSpec(memory_space=pltpu.MemorySpace.SMEM)   # scalar mask index
    args = (mask_idx, x, p["wqkv"], p["wo"], p["bo"],
            p["g1"], p["be1"], p["w1"], p["b1"], p["w2"], p["b2"],
            p["g2"], p["be2"], p["w_vocab"], p["b_vocab"])
    return pl.pallas_call(
        fused_mlm_kernel,
        out_shape=jax.ShapeDtypeStruct((1, V), jnp.float32),
        in_specs=[smem] + [vmem] * (len(args) - 1),
        out_specs=vmem,
    )(*args)


# ----------------------------------------------------------------------------
# Parameter init + end-to-end forward (glue in plain JAX)
# ----------------------------------------------------------------------------
def init_params(key):
    ks = jax.random.split(key, 12)
    s = 0.02
    wq = jax.random.normal(ks[2], (D, D), jnp.float32) * s
    wk = jax.random.normal(ks[3], (D, D), jnp.float32) * s
    wv = jax.random.normal(ks[4], (D, D), jnp.float32) * s
    return {
        "word_emb": jax.random.normal(ks[0], (V, D), jnp.float32) * s,
        "pos_emb":  jax.random.normal(ks[1], (S, D), jnp.float32) * s,
        "wqkv": jnp.concatenate([wq, wk, wv], axis=1),     # fused [D, 3D]
        "wo": jax.random.normal(ks[5], (D, D), jnp.float32) * s,
        "bo": jnp.zeros((1, D), jnp.float32),
        "g1": jnp.ones((1, D), jnp.float32),
        "be1": jnp.zeros((1, D), jnp.float32),
        "w1": jax.random.normal(ks[6], (D, F), jnp.float32) * s,
        "b1": jnp.zeros((1, F), jnp.float32),
        "w2": jax.random.normal(ks[7], (F, D), jnp.float32) * s,
        "b2": jnp.zeros((1, D), jnp.float32),
        "g2": jnp.ones((1, D), jnp.float32),
        "be2": jnp.zeros((1, D), jnp.float32),
        "w_vocab": jax.random.normal(ks[8], (D, V), jnp.float32) * s,
        "b_vocab": jnp.zeros((1, V), jnp.float32),
    }


def llm_forward(params, token_ids, mask_idx):
    # Embedding lookup (glue): word + positional embeddings -> [S, D]
    x = params["word_emb"][token_ids] + params["pos_emb"]
    logits_mask = mlm_forward_at_mask(x, params, mask_idx)   # single Pallas kernel
    return logits_mask[0]                                    # [V]


if __name__ == "__main__":
    key = jax.random.PRNGKey(0)
    pkey, ikey = jax.random.split(key)
    params = init_params(pkey)

    # Deterministic "tokenized" input with a [MASK] token at MASK_POS.
    token_ids = jax.random.randint(ikey, (S,), 0, V - 1, dtype=jnp.int32)
    token_ids = token_ids.at[MASK_POS].set(MASK_ID)
    mask_idx = jnp.array([MASK_POS], dtype=jnp.int32)

    logits_mask = llm_forward(params, token_ids, mask_idx)
    jax.block_until_ready(logits_mask)
    assert logits_mask.shape == (V,)
    print("KERNEL_OK")
</pallas_src>

<mosaic_0001>
module attributes {stable_mosaic.version = 11 : i64} {
  func.func @fused_mlm_kernel(%arg0: memref<1xi32, #tpu.memory_space<smem>>, %arg1: memref<8x32xf32, #tpu.memory_space<vmem>>, %arg2: memref<32x96xf32, #tpu.memory_space<vmem>>, %arg3: memref<32x32xf32, #tpu.memory_space<vmem>>, %arg4: memref<1x32xf32, #tpu.memory_space<vmem>>, %arg5: memref<1x32xf32, #tpu.memory_space<vmem>>, %arg6: memref<1x32xf32, #tpu.memory_space<vmem>>, %arg7: memref<32x64xf32, #tpu.memory_space<vmem>>, %arg8: memref<1x64xf32, #tpu.memory_space<vmem>>, %arg9: memref<64x32xf32, #tpu.memory_space<vmem>>, %arg10: memref<1x32xf32, #tpu.memory_space<vmem>>, %arg11: memref<1x32xf32, #tpu.memory_space<vmem>>, %arg12: memref<1x32xf32, #tpu.memory_space<vmem>>, %arg13: memref<32x512xf32, #tpu.memory_space<vmem>>, %arg14: memref<1x512xf32, #tpu.memory_space<vmem>>, %arg15: memref<1x512xf32, #tpu.memory_space<vmem>>) attributes {dimension_semantics = [], scalar_prefetch = 0 : i64, scratch_operands = 0 : i64, tpu.core_type = #tpu.core_type<tc>} {
    %c0 = arith.constant 0 : index
    %c0_0 = arith.constant 0 : index
    %0 = vector.load %arg1[%c0, %c0_0] : memref<8x32xf32, #tpu.memory_space<vmem>>, vector<8x32xf32>
    %c0_1 = arith.constant 0 : index
    %c0_2 = arith.constant 0 : index
    %1 = vector.load %arg2[%c0_1, %c0_2] : memref<32x96xf32, #tpu.memory_space<vmem>>, vector<32x96xf32>
    %cst = arith.constant dense<0.000000e+00> : vector<8x96xf32>
    %2 = tpu.matmul %0, %1, %cst {dimension_numbers = #tpu.dot_dimension_numbers<[1], [0], [0], [1], [0, 0, 1, 1], [], []>} : vector<8x32xf32>, vector<32x96xf32>, vector<8x96xf32> -> vector<8x96xf32>
    %3 = vector.extract_strided_slice %2 {offsets = [0, 0], sizes = [8, 32], strides = [1, 1]} : vector<8x96xf32> to vector<8x32xf32>
    %4 = vector.extract_strided_slice %2 {offsets = [0, 32], sizes = [8, 32], strides = [1, 1]} : vector<8x96xf32> to vector<8x32xf32>
    %5 = vector.extract_strided_slice %2 {offsets = [0, 64], sizes = [8, 32], strides = [1, 1]} : vector<8x96xf32> to vector<8x32xf32>
    %6 = tpu.transpose %4, [1, 0] : vector<8x32xf32> -> vector<32x8xf32>
    %cst_3 = arith.constant dense<0.000000e+00> : vector<8x8xf32>
    %7 = tpu.matmul %3, %6, %cst_3 {dimension_numbers = #tpu.dot_dimension_numbers<[1], [0], [0], [1], [0, 0, 1, 1], [], []>} : vector<8x32xf32>, vector<32x8xf32>, vector<8x8xf32> -> vector<8x8xf32>
    %cst_4 = arith.constant 3.200000e+01 : f32
    %8 = math.sqrt %cst_4 : f32
    %cst_5 = arith.constant 1.000000e+00 : f32
    %9 = arith.divf %cst_5, %8 : f32
    %10 = vector.broadcast %9 : f32 to vector<8x8xf32>
    %11 = arith.mulf %7, %10 : vector<8x8xf32>
    %cst_6 = arith.constant dense<0xFF800000> : vector<8xf32>
    %12 = vector.multi_reduction <maximumf>, %11, %cst_6 [1] : vector<8x8xf32> to vector<8xf32>
    %13 = vector.shape_cast %12 : vector<8xf32> to vector<8x1xf32>
    %14 = vector.broadcast %13 : vector<8x1xf32> to vector<8x8xf32>
    %15 = arith.subf %11, %14 : vector<8x8xf32>
    %16 = math.exp %15 : vector<8x8xf32>
    %cst_7 = arith.constant dense<0.000000e+00> : vector<8xf32>
    %17 = vector.multi_reduction <add>, %16, %cst_7 [1] : vector<8x8xf32> to vector<8xf32>
    %18 = vector.shape_cast %17 : vector<8xf32> to vector<8x1xf32>
    %19 = tpu.reciprocal %18 {approx = true} : vector<8x1xf32> -> vector<8x1xf32>
    %20 = vector.broadcast %19 : vector<8x1xf32> to vector<8x8xf32>
    %21 = arith.mulf %16, %20 : vector<8x8xf32>
    %cst_8 = arith.constant dense<0.000000e+00> : vector<8x32xf32>
    %22 = tpu.matmul %21, %5, %cst_8 {dimension_numbers = #tpu.dot_dimension_numbers<[1], [0], [0], [1], [0, 0, 1, 1], [], []>} : vector<8x8xf32>, vector<8x32xf32>, vector<8x32xf32> -> vector<8x32xf32>
    %c0_9 = arith.constant 0 : index
    %c0_10 = arith.constant 0 : index
    %23 = vector.load %arg3[%c0_9, %c0_10] : memref<32x32xf32, #tpu.memory_space<vmem>>, vector<32x32xf32>
    %cst_11 = arith.constant dense<0.000000e+00> : vector<8x32xf32>
    %24 = tpu.matmul %22, %23, %cst_11 {dimension_numbers = #tpu.dot_dimension_numbers<[1], [0], [0], [1], [0, 0, 1, 1], [], []>} : vector<8x32xf32>, vector<32x32xf32>, vector<8x32xf32> -> vector<8x32xf32>
    %c0_12 = arith.constant 0 : index
    %c0_13 = arith.constant 0 : index
    %25 = vector.load %arg4[%c0_12, %c0_13] : memref<1x32xf32, #tpu.memory_space<vmem>>, vector<1x32xf32>
    %26 = vector.broadcast %25 : vector<1x32xf32> to vector<8x32xf32>
    %27 = arith.addf %24, %26 : vector<8x32xf32>
    %28 = arith.addf %0, %27 : vector<8x32xf32>
    %cst_14 = arith.constant dense<0.000000e+00> : vector<8xf32>
    %29 = vector.multi_reduction <add>, %28, %cst_14 [1] : vector<8x32xf32> to vector<8xf32>
    %30 = vector.shape_cast %29 : vector<8xf32> to vector<8x1xf32>
    %cst_15 = arith.constant 3.200000e+01 : f32
    %31 = vector.broadcast %cst_15 : f32 to vector<8x1xf32>
    %32 = arith.divf %30, %31 : vector<8x1xf32>
    %33 = vector.broadcast %32 : vector<8x1xf32> to vector<8x32xf32>
    %34 = arith.subf %28, %33 : vector<8x32xf32>
    %35 = arith.mulf %34, %34 : vector<8x32xf32>
    %cst_16 = arith.constant dense<0.000000e+00> : vector<8xf32>
    %36 = vector.multi_reduction <add>, %35, %cst_16 [1] : vector<8x32xf32> to vector<8xf32>
    %37 = vector.shape_cast %36 : vector<8xf32> to vector<8x1xf32>
    %cst_17 = arith.constant 3.200000e+01 : f32
    %38 = vector.broadcast %cst_17 : f32 to vector<8x1xf32>
    %39 = arith.divf %37, %38 : vector<8x1xf32>
    %40 = vector.broadcast %32 : vector<8x1xf32> to vector<8x32xf32>
    %41 = arith.subf %28, %40 : vector<8x32xf32>
    %cst_18 = arith.constant 9.99999974E-6 : f32
    %42 = vector.broadcast %cst_18 : f32 to vector<8x1xf32>
    %43 = arith.addf %39, %42 : vector<8x1xf32>
    %44 = math.rsqrt %43 : vector<8x1xf32>
    %45 = vector.broadcast %44 : vector<8x1xf32> to vector<8x32xf32>
    %46 = arith.mulf %41, %45 : vector<8x32xf32>
    %c0_19 = arith.constant 0 : index
    %c0_20 = arith.constant 0 : index
    %47 = vector.load %arg5[%c0_19, %c0_20] : memref<1x32xf32, #tpu.memory_space<vmem>>, vector<1x32xf32>
    %48 = vector.broadcast %47 : vector<1x32xf32> to vector<8x32xf32>
    %49 = arith.mulf %46, %48 : vector<8x32xf32>
    %c0_21 = arith.constant 0 : index
    %c0_22 = arith.constant 0 : index
    %50 = vector.load %arg6[%c0_21, %c0_22] : memref<1x32xf32, #tpu.memory_space<vmem>>, vector<1x32xf32>
    %51 = vector.broadcast %50 : vector<1x32xf32> to vector<8x32xf32>
    %52 = arith.addf %49, %51 : vector<8x32xf32>
    %c0_23 = arith.constant 0 : index
    %c0_24 = arith.constant 0 : index
    %53 = vector.load %arg7[%c0_23, %c0_24] : memref<32x64xf32, #tpu.memory_space<vmem>>, vector<32x64xf32>
    %cst_25 = arith.constant dense<0.000000e+00> : vector<8x64xf32>
    %54 = tpu.matmul %52, %53, %cst_25 {dimension_numbers = #tpu.dot_dimension_numbers<[1], [0], [0], [1], [0, 0, 1, 1], [], []>} : vector<8x32xf32>, vector<32x64xf32>, vector<8x64xf32> -> vector<8x64xf32>
    %c0_26 = arith.constant 0 : index
    %c0_27 = arith.constant 0 : index
    %55 = vector.load %arg8[%c0_26, %c0_27] : memref<1x64xf32, #tpu.memory_space<vmem>>, vector<1x64xf32>
    %56 = vector.broadcast %55 : vector<1x64xf32> to vector<8x64xf32>
    %57 = arith.addf %54, %56 : vector<8x64xf32>
    %cst_28 = arith.constant 5.000000e-01 : f32
    %58 = vector.broadcast %cst_28 : f32 to vector<8x64xf32>
    %59 = arith.mulf %58, %57 : vector<8x64xf32>
    %cst_29 = arith.constant 4.471500e-02 : f32
    %60 = vector.broadcast %cst_29 : f32 to vector<8x64xf32>
    %61 = arith.mulf %60, %57 : vector<8x64xf32>
    %62 = arith.mulf %61, %57 : vector<8x64xf32>
    %63 = arith.mulf %62, %57 : vector<8x64xf32>
    %64 = arith.addf %57, %63 : vector<8x64xf32>
    %cst_30 = arith.constant 0.797884583 : f32
    %65 = vector.broadcast %cst_30 : f32 to vector<8x64xf32>
    %66 = arith.mulf %65, %64 : vector<8x64xf32>
    %67 = math.tanh %66 : vector<8x64xf32>
    %cst_31 = arith.constant 1.000000e+00 : f32
    %68 = vector.broadcast %cst_31 : f32 to vector<8x64xf32>
    %69 = arith.addf %68, %67 : vector<8x64xf32>
    %70 = arith.mulf %59, %69 : vector<8x64xf32>
    %c0_32 = arith.constant 0 : index
    %c0_33 = arith.constant 0 : index
    %71 = vector.load %arg9[%c0_32, %c0_33] : memref<64x32xf32, #tpu.memory_space<vmem>>, vector<64x32xf32>
    %cst_34 = arith.constant dense<0.000000e+00> : vector<8x32xf32>
    %72 = tpu.matmul %70, %71, %cst_34 {dimension_numbers = #tpu.dot_dimension_numbers<[1], [0], [0], [1], [0, 0, 1, 1], [], []>} : vector<8x64xf32>, vector<64x32xf32>, vector<8x32xf32> -> vector<8x32xf32>
    %c0_35 = arith.constant 0 : index
    %c0_36 = arith.constant 0 : index
    %73 = vector.load %arg10[%c0_35, %c0_36] : memref<1x32xf32, #tpu.memory_space<vmem>>, vector<1x32xf32>
    %74 = vector.broadcast %73 : vector<1x32xf32> to vector<8x32xf32>
    %75 = arith.addf %72, %74 : vector<8x32xf32>
    %76 = arith.addf %52, %75 : vector<8x32xf32>
    %cst_37 = arith.constant dense<0.000000e+00> : vector<8xf32>
    %77 = vector.multi_reduction <add>, %76, %cst_37 [1] : vector<8x32xf32> to vector<8xf32>
    %78 = vector.shape_cast %77 : vector<8xf32> to vector<8x1xf32>
    %cst_38 = arith.constant 3.200000e+01 : f32
    %79 = vector.broadcast %cst_38 : f32 to vector<8x1xf32>
    %80 = arith.divf %78, %79 : vector<8x1xf32>
    %81 = vector.broadcast %80 : vector<8x1xf32> to vector<8x32xf32>
    %82 = arith.subf %76, %81 : vector<8x32xf32>
    %83 = arith.mulf %82, %82 : vector<8x32xf32>
    %cst_39 = arith.constant dense<0.000000e+00> : vector<8xf32>
    %84 = vector.multi_reduction <add>, %83, %cst_39 [1] : vector<8x32xf32> to vector<8xf32>
    %85 = vector.shape_cast %84 : vector<8xf32> to vector<8x1xf32>
    %cst_40 = arith.constant 3.200000e+01 : f32
    %86 = vector.broadcast %cst_40 : f32 to vector<8x1xf32>
    %87 = arith.divf %85, %86 : vector<8x1xf32>
    %88 = vector.broadcast %80 : vector<8x1xf32> to vector<8x32xf32>
    %89 = arith.subf %76, %88 : vector<8x32xf32>
    %cst_41 = arith.constant 9.99999974E-6 : f32
    %90 = vector.broadcast %cst_41 : f32 to vector<8x1xf32>
    %91 = arith.addf %87, %90 : vector<8x1xf32>
    %92 = math.rsqrt %91 : vector<8x1xf32>
    %93 = vector.broadcast %92 : vector<8x1xf32> to vector<8x32xf32>
    %94 = arith.mulf %89, %93 : vector<8x32xf32>
    %c0_42 = arith.constant 0 : index
    %c0_43 = arith.constant 0 : index
    %95 = vector.load %arg11[%c0_42, %c0_43] : memref<1x32xf32, #tpu.memory_space<vmem>>, vector<1x32xf32>
    %96 = vector.broadcast %95 : vector<1x32xf32> to vector<8x32xf32>
    %97 = arith.mulf %94, %96 : vector<8x32xf32>
    %c0_44 = arith.constant 0 : index
    %c0_45 = arith.constant 0 : index
    %98 = vector.load %arg12[%c0_44, %c0_45] : memref<1x32xf32, #tpu.memory_space<vmem>>, vector<1x32xf32>
    %99 = vector.broadcast %98 : vector<1x32xf32> to vector<8x32xf32>
    %100 = arith.addf %97, %99 : vector<8x32xf32>
    %c0_46 = arith.constant 0 : index
    %101 = memref.load %arg0[%c0_46] : memref<1xi32, #tpu.memory_space<smem>>
    %c0_i32 = arith.constant 0 : i32
    %102 = arith.maxsi %101, %c0_i32 : i32
    %c7_i32 = arith.constant 7 : i32
    %103 = arith.minsi %102, %c7_i32 : i32
    %104 = tpu.iota {dimensions = array<i32: 0>} : vector<8x1xi32>
    %105 = vector.broadcast %103 : i32 to vector<8x1xi32>
    %106 = arith.cmpi eq, %104, %105 : vector<8x1xi32>
    %cst_47 = arith.constant 0.000000e+00 : f32
    %107 = vector.shape_cast %106 : vector<8x1xi1> to vector<8x1xi1>
    %108 = vector.broadcast %107 : vector<8x1xi1> to vector<8x32xi1>
    %109 = vector.broadcast %cst_47 : f32 to vector<8x32xf32>
    %110 = arith.select %108, %100, %109 : vector<8x32xi1>, vector<8x32xf32>
    %cst_48 = arith.constant dense<0.000000e+00> : vector<32xf32>
    %111 = vector.multi_reduction <add>, %110, %cst_48 [0] : vector<8x32xf32> to vector<32xf32>
    %112 = vector.shape_cast %111 : vector<32xf32> to vector<1x32xf32>
    %c0_49 = arith.constant 0 : index
    %c0_50 = arith.constant 0 : index
    %113 = vector.load %arg13[%c0_49, %c0_50] : memref<32x512xf32, #tpu.memory_space<vmem>>, vector<32x512xf32>
    %cst_51 = arith.constant dense<0.000000e+00> : vector<1x512xf32>
    %114 = tpu.matmul %112, %113, %cst_51 {dimension_numbers = #tpu.dot_dimension_numbers<[1], [0], [0], [1], [0, 0, 1, 1], [], []>} : vector<1x32xf32>, vector<32x512xf32>, vector<1x512xf32> -> vector<1x512xf32>
    %c0_52 = arith.constant 0 : index
    %c0_53 = arith.constant 0 : index
    %115 = vector.load %arg14[%c0_52, %c0_53] : memref<1x512xf32, #tpu.memory_space<vmem>>, vector<1x512xf32>
    %116 = arith.addf %114, %115 : vector<1x512xf32>
    %c0_54 = arith.constant 0 : index
    %c0_55 = arith.constant 0 : index
    %117 = vector.load %arg15[%c0_54, %c0_55] : memref<1x512xf32, #tpu.memory_space<vmem>>, vector<1x512xf32>
    tpu.vector_store %arg15[%c0_54, %c0_55], %116 {strides = array<i32>} : memref<1x512xf32, #tpu.memory_space<vmem>>, vector<1x512xf32>,
    return
  }
}

</mosaic_0001>

<llo_original>
// kernel: tpu_custom_call.1
$region0: #{tpu_custom_call.1}
  #allocation0 [shape = 'u32[]', space=smem, size = 0x4, offset = 0x4, fixed_abs, tag = 'smem constant byte address 0x4 - core index']
  #allocation1 [shape = 'u32[72,128]{1,0:T(1,128)}', space=vmem, size = 0x9000, scoped, tag = 'internal scratch']
  #allocation2 [shape = 's32[1]{0:T(128)S(6)}', space=smem, size = 0x200, scoped, tag = 'scoped memory for tpu_custom_call.1']
  %s0 = inlined_call_operand.<no memory space> [shape: s32[1], index: 0, kind: input, shape index: {}]
  %s1 = inlined_call_operand.hbm [shape: f32[8,32], index: 1, kind: input, shape index: {}]
  %s2 = inlined_call_operand.vmem [shape: f32[32,96], index: 2, kind: input, shape index: {}]
  %s3 = inlined_call_operand.vmem [shape: f32[32,32], index: 3, kind: input, shape index: {}]
  %s4 = inlined_call_operand.vmem [shape: f32[1,32], index: 4, kind: input, shape index: {}]
  %s5 = inlined_call_operand.hbm [shape: f32[1,32], index: 5, kind: input, shape index: {}]
  %s6 = inlined_call_operand.hbm [shape: f32[1,32], index: 6, kind: input, shape index: {}]
  %s7 = inlined_call_operand.vmem [shape: f32[32,64], index: 7, kind: input, shape index: {}]
  %s8 = inlined_call_operand.vmem [shape: f32[1,64], index: 8, kind: input, shape index: {}]
  %s9 = inlined_call_operand.vmem [shape: f32[64,32], index: 9, kind: input, shape index: {}]
  %s10 = inlined_call_operand.vmem [shape: f32[1,32], index: 10, kind: input, shape index: {}]
  %s11 = inlined_call_operand.vmem [shape: f32[1,32], index: 11, kind: input, shape index: {}]
  %s12 = inlined_call_operand.vmem [shape: f32[1,32], index: 12, kind: input, shape index: {}]
  %s13 = inlined_call_operand.hbm [shape: f32[32,512], index: 13, kind: input, shape index: {}]
  %s14 = inlined_call_operand.vmem [shape: f32[1,512], index: 14, kind: input, shape index: {}]
  %s15 = inlined_call_operand.hbm [shape: f32[1,512], index: 15, kind: output, shape index: {}]
  %s16 = sld [smem:[#allocation0]]
  $region86: #{tpu_custom_call.1} parent=0
    _
  %s18 = ssub.s32 1, %s16
  %s19 = scalar_select 0, %s18, %s16
  %20 = sst [smem:[#allocation2]] %s0
  $region1: #{tpu_custom_call.1} parent=0
    #allocation3 [shape = 'u8[4096]{0}', space=vmem, size = 0x1000, scoped, tag = 'input window, operand 1, single buffered']
    #allocation4 [shape = 's32[1]{0}', space=sflag, size = 0x4, scoped, tag = 'scoped memory for tpu_custom_call.1']
    #allocation5 [shape = 's32[1]{0}', space=sflag, size = 0x4, scoped, tag = 'scoped memory for tpu_custom_call.1']
    #allocation6 [shape = 'u8[512]{0}', space=vmem, size = 0x400, scoped, tag = 'input window, operand 5, single buffered']
    #allocation7 [shape = 's32[1]{0}', space=sflag, size = 0x4, scoped, tag = 'scoped memory for tpu_custom_call.1']
    #allocation8 [shape = 'u8[512]{0}', space=vmem, size = 0x400, scoped, tag = 'input window, operand 6, single buffered']
    #allocation9 [shape = 'u8[65536]{0}', space=vmem, size = 0x10000, scoped, tag = 'input window, operand 13, single buffered']
    #allocation10 [shape = 's32[1]{0}', space=sflag, size = 0x4, scoped, tag = 'scoped memory for tpu_custom_call.1']
    #allocation11 [shape = 'u8[2048]{0}', space=vmem, size = 0x800, scoped, tag = 'output window, operand 0, single buffered']
    %21 = vsyncpa [#allocation4], 0
    %22 = vsyncpa [#allocation7], 0
    %23 = vsyncpa [#allocation10], 0
    %24 = vsyncpa [#allocation5], 0
    // Predicated region
    $region2: #{tpu_custom_call.1} parent=1 // pred_check
      _
    $region3: #{tpu_custom_call.1} parent=1 // pred_check_branch
      %26 = sbr.rel (0) target = $region5
    $region4: #{tpu_custom_call.1} parent=1 // pred_region
      _
    $region5: #{tpu_custom_call.1} parent=1 // pred_fallthru
      _
    // Predicated region
    $region6: #{tpu_custom_call.1} parent=1 // pred_check
      _
    $region7: #{tpu_custom_call.1} parent=1 // pred_check_branch
      %28 = sbr.rel (0) target = $region9
    $region8: #{tpu_custom_call.1} parent=1 // pred_region
      %30 = vsyncadd [#allocation4], 0
      %s32 = sshll.u32 %s1, 4
      %s33 = int_to_ptr.hbm [resolvable:$true] %s32
      %s34 = sshll.u32 [#allocation3], 4
      %s35 = int_to_ptr.vmem [resolvable:$true] %s34
      %37 = dma.hbm_to_vmem [thread:$0]  %s33, 128, %s35, [#allocation4]
    $region9: #{tpu_custom_call.1} parent=1 // pred_fallthru
      _
    // Predicated region
    $region10: #{tpu_custom_call.1} parent=1 // pred_check
      _
    $region11: #{tpu_custom_call.1} parent=1 // pred_check_branch
      %39 = sbr.rel (0) target = $region13
    $region12: #{tpu_custom_call.1} parent=1 // pred_region
      _
    $region13: #{tpu_custom_call.1} parent=1 // pred_fallthru
      _
    // Predicated region
    $region14: #{tpu_custom_call.1} parent=1 // pred_check
      _
    $region15: #{tpu_custom_call.1} parent=1 // pred_check_branch
      %41 = sbr.rel (0) target = $region17
    $region16: #{tpu_custom_call.1} parent=1 // pred_region
      _
    $region17: #{tpu_custom_call.1} parent=1 // pred_fallthru
      _
    // Predicated region
    $region18: #{tpu_custom_call.1} parent=1 // pred_check
      _
    $region19: #{tpu_custom_call.1} parent=1 // pred_check_branch
      %43 = sbr.rel (0) target = $region21
    $region20: #{tpu_custom_call.1} parent=1 // pred_region
      _
    $region21: #{tpu_custom_call.1} parent=1 // pred_fallthru
      _
    // Predicated region
    $region22: #{tpu_custom_call.1} parent=1 // pred_check
      _
    $region23: #{tpu_custom_call.1} parent=1 // pred_check_branch
      %45 = sbr.rel (0) target = $region25
    $region24: #{tpu_custom_call.1} parent=1 // pred_region
      %47 = vsyncadd [#allocation7], 0
      %s49 = sshll.u32 %s5, 4
      %s50 = int_to_ptr.hbm [resolvable:$true] %s49
      %s51 = sshll.u32 [#allocation6], 4
      %s52 = int_to_ptr.vmem [resolvable:$true] %s51
      %54 = dma.hbm_to_vmem [thread:$0]  %s50, 16, %s52, [#allocation7]
    $region25: #{tpu_custom_call.1} parent=1 // pred_fallthru
      _
    // Predicated region
    $region26: #{tpu_custom_call.1} parent=1 // pred_check
      _
    $region27: #{tpu_custom_call.1} parent=1 // pred_check_branch
      %56 = sbr.rel (0) target = $region29
    $region28: #{tpu_custom_call.1} parent=1 // pred_region
      %58 = vsyncadd [#allocation7], 0
      %s60 = sshll.u32 %s6, 4
      %s61 = int_to_ptr.hbm [resolvable:$true] %s60
      %s62 = sshll.u32 [#allocation8], 4
      %s63 = int_to_ptr.vmem [resolvable:$true] %s62
      %65 = dma.hbm_to_vmem [thread:$0]  %s61, 16, %s63, [#allocation7]
    $region29: #{tpu_custom_call.1} parent=1 // pred_fallthru
      _
    // Predicated region
    $region30: #{tpu_custom_call.1} parent=1 // pred_check
      _
    $region31: #{tpu_custom_call.1} parent=1 // pred_check_branch
      %67 = sbr.rel (0) target = $region33
    $region32: #{tpu_custom_call.1} parent=1 // pred_region
      _
    $region33: #{tpu_custom_call.1} parent=1 // pred_fallthru
      _
    // Predicated region
    $region34: #{tpu_custom_call.1} parent=1 // pred_check
      _
    $region35: #{tpu_custom_call.1} parent=1 // pred_check_branch
      %69 = sbr.rel (0) target = $region37
    $region36: #{tpu_custom_call.1} parent=1 // pred_region
      _
    $region37: #{tpu_custom_call.1} parent=1 // pred_fallthru
      _
    // Predicated region
    $region38: #{tpu_custom_call.1} parent=1 // pred_check
      _
    $region39: #{tpu_custom_call.1} parent=1 // pred_check_branch
      %71 = sbr.rel (0) target = $region41
    $region40: #{tpu_custom_call.1} parent=1 // pred_region
      _
    $region41: #{tpu_custom_call.1} parent=1 // pred_fallthru
      _
    // Predicated region
    $region42: #{tpu_custom_call.1} parent=1 // pred_check
      _
    $region43: #{tpu_custom_call.1} parent=1 // pred_check_branch
      %73 = sbr.rel (0) target = $region45
    $region44: #{tpu_custom_call.1} parent=1 // pred_region
      _
    $region45: #{tpu_custom_call.1} parent=1 // pred_fallthru
      _
    // Predicated region
    $region46: #{tpu_custom_call.1} parent=1 // pred_check
      _
    $region47: #{tpu_custom_call.1} parent=1 // pred_check_branch
      %75 = sbr.rel (0) target = $region49
    $region48: #{tpu_custom_call.1} parent=1 // pred_region
      _
    $region49: #{tpu_custom_call.1} parent=1 // pred_fallthru
      _
    // Predicated region
    $region50: #{tpu_custom_call.1} parent=1 // pred_check
      _
    $region51: #{tpu_custom_call.1} parent=1 // pred_check_branch
      %77 = sbr.rel (0) target = $region53
    $region52: #{tpu_custom_call.1} parent=1 // pred_region
      _
    $region53: #{tpu_custom_call.1} parent=1 // pred_fallthru
      _
    // Predicated region
    $region54: #{tpu_custom_call.1} parent=1 // pred_check
      _
    $region55: #{tpu_custom_call.1} parent=1 // pred_check_branch
      %79 = sbr.rel (0) target = $region57
    $region56: #{tpu_custom_call.1} parent=1 // pred_region
      %81 = vsyncadd [#allocation10], 0
      %s82 = sshll.u32 %s13, 4
      %s83 = int_to_ptr.hbm [resolvable:$true] %s82
      %s84 = sshll.u32 [#allocation9], 4
      %s85 = int_to_ptr.vmem [resolvable:$true] %s84
      %90 = dma.hbm_to_vmem [thread:$0]  %s83, 2048, %s85, [#allocation10], 512, 512, 32
    $region57: #{tpu_custom_call.1} parent=1 // pred_fallthru
      _
    // Predicated region
    $region58: #{tpu_custom_call.1} parent=1 // pred_check
      _
    $region59: #{tpu_custom_call.1} parent=1 // pred_check_branch
      %92 = sbr.rel (0) target = $region61
    $region60: #{tpu_custom_call.1} parent=1 // pred_region
      _
    $region61: #{tpu_custom_call.1} parent=1 // pred_fallthru
      _
    // Predicated region
    $region62: #{tpu_custom_call.1} parent=1 // pred_check
      _
    $region63: #{tpu_custom_call.1} parent=1 // pred_check_branch
      %94 = sbr.rel (0) target = $region65
    $region64: #{tpu_custom_call.1} parent=1 // pred_region
      %96 = dma.done [#allocation4], 128
    $region65: #{tpu_custom_call.1} parent=1 // pred_fallthru
      _
    // Predicated region
    $region66: #{tpu_custom_call.1} parent=1 // pred_check
      _
    $region67: #{tpu_custom_call.1} parent=1 // pred_check_branch
      %98 = sbr.rel (0) target = $region69
    $region68: #{tpu_custom_call.1} parent=1 // pred_region
      %100 = dma.done [#allocation7], 16
    $region69: #{tpu_custom_call.1} parent=1 // pred_fallthru
      _
    // Predicated region
    $region70: #{tpu_custom_call.1} parent=1 // pred_check
      _
    $region71: #{tpu_custom_call.1} parent=1 // pred_check_branch
      %102 = sbr.rel (0) target = $region73
    $region72: #{tpu_custom_call.1} parent=1 // pred_region
      %104 = dma.done [#allocation7], 16
    $region73: #{tpu_custom_call.1} parent=1 // pred_fallthru
      _
    // Predicated region
    $region74: #{tpu_custom_call.1} parent=1 // pred_check
      _
    $region75: #{tpu_custom_call.1} parent=1 // pred_check_branch
      %106 = sbr.rel (0) target = $region77
    $region76: #{tpu_custom_call.1} parent=1 // pred_region
      %108 = dma.done [#allocation10], 2048
    $region77: #{tpu_custom_call.1} parent=1 // pred_fallthru
      _
    %v109 = vld [vmem:[#allocation3] sm:$0xff]
    %v110 = vld [vmem:[%s2] sm:$0xff]
    %v111 = vld [vmem:[%s2 + $0x8] sm:$0xff]
    %v112 = vld [vmem:[%s2 + $0x10] sm:$0xff]
    %v113 = vld [vmem:[%s2 + $0x18] sm:$0xff]
    %vm114 = vcmask 261120
    %v116 = vsel %vm114, %v109, 0
    %118 = vmatpush.msra.mxu0 0.0
    %119 = vmatpush.msra.mxu0 0.0
    %120 = vmatpush.msra.mxu0 0.0
    %121 = vmatpush.msra.mxu0 0.0
    %122 = vmatpush.msra.mxu0 0.0
    %123 = vmatpush.msra.mxu0 0.0
    %124 = vmatpush.msra.mxu0 0.0
    %125 = vmatpush.msra.mxu0 0.0
    %126 = vmatpush.msra.mxu0 0.0
    %127 = vmatpush.msra.mxu0 0.0
    %128 = vmatpush.msra.mxu0 0.0
    %129 = vmatpush.msra.mxu0 0.0
    %130 = vmatpush.msra.mxu0 %v113
    %131 = vmatpush.msra.mxu0 %v112
    %132 = vmatpush.msra.mxu0 %v111
    %133 = vmatpush.msra.mxu0 %v110
    %134 = vmatmul.f32.gmra.mxu0 %v116
    %v135 = vpop.f32.mrf.mxu0
    %v136 = vadd.f32 0.0, %v135
    %137 = vdwg.mxu0
    %139 = vrot.lane.b32.xlu0 %v136, 96
    %v140 = vpop.permute.xlu0 %139
    %v141 = vsel %vm114, %v136, 0
    %v143 = vsel %vm114, %v140, 0
    %145 = vmatpush.xpose.msra.mxu0 0.0
    %146 = vmatpush.xpose.msra.mxu0 0.0
    %147 = vmatpush.xpose.msra.mxu0 0.0
    %148 = vmatpush.xpose.msra.mxu0 0.0
    %149 = vmatpush.xpose.msra.mxu0 0.0
    %150 = vmatpush.xpose.msra.mxu0 0.0
    %151 = vmatpush.xpose.msra.mxu0 0.0
    %152 = vmatpush.xpose.msra.mxu0 0.0
    %153 = vmatpush.xpose.msra.mxu0 0.0
    %154 = vmatpush.xpose.msra.mxu0 0.0
    %155 = vmatpush.xpose.msra.mxu0 0.0
    %156 = vmatpush.xpose.msra.mxu0 0.0
    %157 = vmatpush.xpose.msra.mxu0 0.0
    %158 = vmatpush.xpose.msra.mxu0 0.0
    %159 = vmatpush.xpose.msra.mxu0 0.0
    %160 = vmatpush.xpose.msra.mxu0 %v143
    %161 = vmatmul.f32.gmra.mxu0 %v141
    %v162 = vpop.f32.mrf.mxu0
    %v163 = vadd.f32 0.0, %v162
    %164 = vdwg.mxu0
    %v165 = vmul.f32 %v163, 0.17677669
    %vm166 = vcmask 64512
    %v167 = vsel %vm166, %v165, -inf
    %168 = vmax.xlane.f32.xlu0 %v167
    %v169 = vpop.xlane.xlu0 %168
    %v170 = vsub.f32 %v165, %v169
    %v171 = vmul.f32 %v170, 1.442695
    %v172 = vpow.pop %v171
    %v173 = vsel %vm166, %v172, 0.0
    %174 = vadd.xlane.f32.xlu0 %v173
    %v175 = vpop.xlane.xlu0 %174
    %v176 = vrcp.pop %v175
    %v177 = vmul.f32 %v172, %v176
    %178 = vrot.lane.b32.xlu0 %v136, 64
    %v179 = vpop.permute.xlu0 %178
    %v182 = vsel %vm166, %v177, 0
    %184 = vmatpush.msra.mxu0 0.0
    %185 = vmatpush.msra.mxu0 0.0
    %186 = vmatpush.msra.mxu0 0.0
    %187 = vmatpush.msra.mxu0 0.0
    %188 = vmatpush.msra.mxu0 0.0
    %189 = vmatpush.msra.mxu0 0.0
    %190 = vmatpush.msra.mxu0 0.0
    %191 = vmatpush.msra.mxu0 0.0
    %192 = vmatpush.msra.mxu0 0.0
    %193 = vmatpush.msra.mxu0 0.0
    %194 = vmatpush.msra.mxu0 0.0
    %195 = vmatpush.msra.mxu0 0.0
    %196 = vmatpush.msra.mxu0 0.0
    %197 = vmatpush.msra.mxu0 0.0
    %198 = vmatpush.msra.mxu0 0.0
    %199 = vmatpush.msra.mxu0 %v179
    %200 = vmatmul.f32.gmra.mxu0 %v182
    %v201 = vpop.f32.mrf.mxu0
    %v202 = vadd.f32 0.0, %v201
    %203 = vdwg.mxu0
    %v204 = vld [vmem:[%s3] sm:$0xff]
    %v205 = vld [vmem:[%s3 + $0x8] sm:$0xff]
    %v206 = vld [vmem:[%s3 + $0x10] sm:$0xff]
    %v207 = vld [vmem:[%s3 + $0x18] sm:$0xff]
    %v208 = vld [vmem:[%s4] sm:$0x1]
    %v210 = vperm.slane %v208, 0
    %v213 = vsel %vm114, %v202, 0
    %215 = vmatpush.msra.mxu0 0.0
    %216 = vmatpush.msra.mxu0 0.0
    %217 = vmatpush.msra.mxu0 0.0
    %218 = vmatpush.msra.mxu0 0.0
    %219 = vmatpush.msra.mxu0 0.0
    %220 = vmatpush.msra.mxu0 0.0
    %221 = vmatpush.msra.mxu0 0.0
    %222 = vmatpush.msra.mxu0 0.0
    %223 = vmatpush.msra.mxu0 0.0
    %224 = vmatpush.msra.mxu0 0.0
    %225 = vmatpush.msra.mxu0 0.0
    %226 = vmatpush.msra.mxu0 0.0
    %227 = vmatpush.msra.mxu0 %v207
    %228 = vmatpush.msra.mxu0 %v206
    %229 = vmatpush.msra.mxu0 %v205
    %230 = vmatpush.msra.mxu0 %v204
    %231 = vmatmul.f32.gmra.mxu0 %v213
    %v232 = vpop.f32.mrf.mxu0
    %v233 = vadd.f32 %v210, %v232
    %234 = vdwg.mxu0
    %v235 = vadd.f32 %v109, %v233
    %v236 = vsel %vm114, %v235, 0.0
    %237 = vadd.xlane.f32.xlu0 %v236
    %v238 = vpop.xlane.xlu0 %237
    %v239 = vrcp.pop 32.0
    %v240 = vmul.f32 32.0, %v239
    %v241 = vsub.f32 1.0, %v240
    %v242 = vmul.f32 %v239, %v241
    %v243 = vadd.f32 %v239, %v242
    %vm244 = vweird.f32 %v239
    %v245 = vsel %vm244, %v239, %v243
    %v246 = vmul.f32 %v238, %v245
    %v247 = vsub.f32 %v235, %v246
    %v248 = vmul.f32 %v247, %v247
    %v249 = vsel %vm114, %v248, 0.0
    %250 = vadd.xlane.f32.xlu0 %v249
    %v251 = vpop.xlane.xlu0 %250
    %v252 = vmul.f32 %v251, %v245
    %v253 = vadd.f32 %v252, 1e-05
    %v254 = vrsqrt.pop %v253
    %v255 = vmul.f32 %v254, %v253
    %v256 = vmul.f32 %v255, %v254
    %v257 = vmul.f32 0.5, %v256
    %v258 = vsub.f32 1.5, %v257
    %v259 = vmul.f32 %v254, %v258
    %vm260 = vweird.f32 %v253
    %vm261 = vweird.f32 %v254
    %vm262 = vmor %vm260, %vm261
    %v263 = vsel %vm262, %v254, %v259
    %v264 = vmul.f32 %v247, %v263
    %v265 = vld [vmem:[#allocation6] sm:$0x1]
    %v267 = vperm.slane %v265, 0
    %v269 = vmul.f32 %v264, %v267
    %v270 = vld [vmem:[#allocation8] sm:$0x1]
    %v272 = vperm.slane %v270, 0
    %v274 = vadd.f32 %v269, %v272
    %v275 = vld [vmem:[%s7] sm:$0xff]
    %v276 = vld [vmem:[%s7 + $0x8] sm:$0xff]
    %v277 = vld [vmem:[%s7 + $0x10] sm:$0xff]
    %v278 = vld [vmem:[%s7 + $0x18] sm:$0xff]
    %v279 = vld [vmem:[%s8] sm:$0x1]
    %v281 = vperm.slane %v279, 0
    %v284 = vsel %vm114, %v274, 0
    %286 = vmatpush.msra.mxu0 0.0
    %287 = vmatpush.msra.mxu0 0.0
    %288 = vmatpush.msra.mxu0 0.0
    %289 = vmatpush.msra.mxu0 0.0
    %290 = vmatpush.msra.mxu0 0.0
    %291 = vmatpush.msra.mxu0 0.0
    %292 = vmatpush.msra.mxu0 0.0
    %293 = vmatpush.msra.mxu0 0.0
    %294 = vmatpush.msra.mxu0 0.0
    %295 = vmatpush.msra.mxu0 0.0
    %296 = vmatpush.msra.mxu0 0.0
    %297 = vmatpush.msra.mxu0 0.0
    %298 = vmatpush.msra.mxu0 %v278
    %299 = vmatpush.msra.mxu0 %v277
    %300 = vmatpush.msra.mxu0 %v276
    %301 = vmatpush.msra.mxu0 %v275
    %302 = vmatmul.f32.gmra.mxu0 %v284
    %v303 = vpop.f32.mrf.mxu0
    %v304 = vadd.f32 %v281, %v303
    %305 = vdwg.mxu0
    %v306 = vmul.f32 %v304, 0.5
    %v307 = vmul.f32 %v304, 0.044715
    %v308 = vmul.f32 %v307, %v304
    %v309 = vmul.f32 %v308, %v304
    %v310 = vadd.f32 %v304, %v309
    %v311 = vmul.f32 %v310, 0.7978846
    %v312 = vtanh.pop %v311
    %v313 = vadd.f32 %v312, 1.0
    %v314 = vmul.f32 %v306, %v313
    %v315 = vld [vmem:[%s9] sm:$0xff]
    %v316 = vld [vmem:[%s9 + $0x8] sm:$0xff]
    %v317 = vld [vmem:[%s9 + $0x10] sm:$0xff]
    %v318 = vld [vmem:[%s9 + $0x18] sm:$0xff]
    %v319 = vld [vmem:[%s9 + $0x20] sm:$0xff]
    %v320 = vld [vmem:[%s9 + $0x28] sm:$0xff]
    %v321 = vld [vmem:[%s9 + $0x30] sm:$0xff]
    %v322 = vld [vmem:[%s9 + $0x38] sm:$0xff]
    %v323 = vld [vmem:[%s10] sm:$0x1]
    %v325 = vperm.slane %v323, 0
    %vm327 = vcmask 523264
    %v329 = vsel %vm327, %v314, 0
    %331 = vmatpush.msra.mxu0 0.0
    %332 = vmatpush.msra.mxu0 0.0
    %333 = vmatpush.msra.mxu0 0.0
    %334 = vmatpush.msra.mxu0 0.0
    %335 = vmatpush.msra.mxu0 0.0
    %336 = vmatpush.msra.mxu0 0.0
    %337 = vmatpush.msra.mxu0 0.0
    %338 = vmatpush.msra.mxu0 0.0
    %339 = vmatpush.msra.mxu0 %v322
    %340 = vmatpush.msra.mxu0 %v321
    %341 = vmatpush.msra.mxu0 %v320
    %342 = vmatpush.msra.mxu0 %v319
    %343 = vmatpush.msra.mxu0 %v318
    %344 = vmatpush.msra.mxu0 %v317
    %345 = vmatpush.msra.mxu0 %v316
    %346 = vmatpush.msra.mxu0 %v315
    %347 = vmatmul.f32.gmra.mxu0 %v329
    %v348 = vpop.f32.mrf.mxu0
    %v349 = vadd.f32 %v325, %v348
    %350 = vdwg.mxu0
    %v351 = vadd.f32 %v274, %v349
    %v352 = vsel %vm114, %v351, 0.0
    %353 = vadd.xlane.f32.xlu0 %v352
    %v354 = vpop.xlane.xlu0 %353
    %v355 = vmul.f32 %v354, %v245
    %v356 = vsub.f32 %v351, %v355
    %v357 = vmul.f32 %v356, %v356
    %v358 = vsel %vm114, %v357, 0.0
    %359 = vadd.xlane.f32.xlu0 %v358
    %v360 = vpop.xlane.xlu0 %359
    %v361 = vmul.f32 %v360, %v245
    %v362 = vadd.f32 %v361, 1e-05
    %v363 = vrsqrt.pop %v362
    %v364 = vmul.f32 %v363, %v362
    %v365 = vmul.f32 %v364, %v363
    %v366 = vmul.f32 0.5, %v365
    %v367 = vsub.f32 1.5, %v366
    %v368 = vmul.f32 %v363, %v367
    %vm369 = vweird.f32 %v362
    %vm370 = vweird.f32 %v363
    %vm371 = vmor %vm369, %vm370
    %v372 = vsel %vm371, %v363, %v368
    %v373 = vmul.f32 %v356, %v372
    %v374 = vld [vmem:[%s11] sm:$0x1]
    %v376 = vperm.slane %v374, 0
    %v378 = vmul.f32 %v373, %v376
    %v379 = vld [vmem:[%s12] sm:$0x1]
    %v381 = vperm.slane %v379, 0
    %v383 = vadd.f32 %v378, %v381
    %s384 = sld [smem:[#allocation2]]
    %p385 = scmp.gt.s32.totalorder %s384, 0
    %s386 = scalar_select %p385, %s384, 0
    %p387 = scmp.lt.s32.totalorder %s386, 7
    %s388 = scalar_select %p387, %s386, 7
    %v389 = vlaneseq
    %v390 = vshrl.u32 %v389, 7
    %v391 = vstv %s388
    %vm392 = vcmp.eq.s32.totalorder %v390, %v391
    %v393 = vsel %vm392, 1, 0
    %vm394 = vcmp.eq.s32.totalorder %v393, 1
    %v395 = vsel %vm394, %v383, 0.0
    %v396 = vsel %vm114, %v395, 0.0
    %v397 = vrot.slane %v396, 4
    %v398 = vadd.f32 %v396, %v397
    %v399 = vrot.slane %v398, 2
    %v400 = vadd.f32 %v398, %v399
    %v401 = vrot.slane %v400, 1
    %v402 = vadd.f32 %v400, %v401
    %v403 = vld [vmem:[#allocation9] sm:$0xff]
    %v404 = vld [vmem:[#allocation9 + $0x8] sm:$0xff]
    %v405 = vld [vmem:[#allocation9 + $0x10] sm:$0xff]
    %v406 = vld [vmem:[#allocation9 + $0x18] sm:$0xff]
    %v407 = vld [vmem:[#allocation9 + $0x20] sm:$0xff]
    %v408 = vld [vmem:[#allocation9 + $0x28] sm:$0xff]
    %v409 = vld [vmem:[#allocation9 + $0x30] sm:$0xff]
    %v410 = vld [vmem:[#allocation9 + $0x38] sm:$0xff]
    %v411 = vld [vmem:[#allocation9 + $0x40] sm:$0xff]
    %v412 = vld [vmem:[#allocation9 + $0x48] sm:$0xff]
    %v413 = vld [vmem:[#allocation9 + $0x50] sm:$0xff]
    %v414 = vld [vmem:[#allocation9 + $0x58] sm:$0xff]
    %v415 = vld [vmem:[#allocation9 + $0x60] sm:$0xff]
    %v416 = vld [vmem:[#allocation9 + $0x68] sm:$0xff]
    %v417 = vld [vmem:[#allocation9 + $0x70] sm:$0xff]
    %v418 = vld [vmem:[#allocation9 + $0x78] sm:$0xff]
    %v419 = vld [vmem:[%s14] sm:$0xf]
    %v421 = vperm.slane %v419, 0
    %v422 = vperm.slane %v419, 1
    %v423 = vperm.slane %v419, 2
    %v424 = vperm.slane %v419, 3
    %v430 = vsel %vm114, %v402, 0
    %432 = vmatpush.msra.mxu0 0.0
    %433 = vmatpush.msra.mxu0 0.0
    %434 = vmatpush.msra.mxu0 0.0
    %435 = vmatpush.msra.mxu0 0.0
    %436 = vmatpush.msra.mxu0 0.0
    %437 = vmatpush.msra.mxu0 0.0
    %438 = vmatpush.msra.mxu0 0.0
    %439 = vmatpush.msra.mxu0 0.0
    %440 = vmatpush.msra.mxu0 0.0
    %441 = vmatpush.msra.mxu0 0.0
    %442 = vmatpush.msra.mxu0 0.0
    %443 = vmatpush.msra.mxu0 0.0
    %444 = vmatpush.msra.mxu0 %v415
    %445 = vmatpush.msra.mxu0 %v411
    %446 = vmatpush.msra.mxu0 %v407
    %447 = vmatpush.msra.mxu0 %v403
    %448 = vmatmul.f32.gmra.mxu0 %v430
    %v449 = vpop.f32.mrf.mxu0
    %v450 = vadd.f32 %v421, %v449
    %451 = vdwg.mxu0
    %452 = vmatpush.msra.mxu0 0.0
    %453 = vmatpush.msra.mxu0 0.0
    %454 = vmatpush.msra.mxu0 0.0
    %455 = vmatpush.msra.mxu0 0.0
    %456 = vmatpush.msra.mxu0 0.0
    %457 = vmatpush.msra.mxu0 0.0
    %458 = vmatpush.msra.mxu0 0.0
    %459 = vmatpush.msra.mxu0 0.0
    %460 = vmatpush.msra.mxu0 0.0
    %461 = vmatpush.msra.mxu0 0.0
    %462 = vmatpush.msra.mxu0 0.0
    %463 = vmatpush.msra.mxu0 0.0
    %464 = vmatpush.msra.mxu0 %v416
    %465 = vmatpush.msra.mxu0 %v412
    %466 = vmatpush.msra.mxu0 %v408
    %467 = vmatpush.msra.mxu0 %v404
    %468 = vmatmul.f32.gmra.mxu0 %v430
    %v469 = vpop.f32.mrf.mxu0
    %v470 = vadd.f32 %v422, %v469
    %471 = vdwg.mxu0
    %472 = vmatpush.msra.mxu0 0.0
    %473 = vmatpush.msra.mxu0 0.0
    %474 = vmatpush.msra.mxu0 0.0
    %475 = vmatpush.msra.mxu0 0.0
    %476 = vmatpush.msra.mxu0 0.0
    %477 = vmatpush.msra.mxu0 0.0
    %478 = vmatpush.msra.mxu0 0.0
    %479 = vmatpush.msra.mxu0 0.0
    %480 = vmatpush.msra.mxu0 0.0
    %481 = vmatpush.msra.mxu0 0.0
    %482 = vmatpush.msra.mxu0 0.0
    %483 = vmatpush.msra.mxu0 0.0
    %484 = vmatpush.msra.mxu0 %v417
    %485 = vmatpush.msra.mxu0 %v413
    %486 = vmatpush.msra.mxu0 %v409
    %487 = vmatpush.msra.mxu0 %v405
    %488 = vmatmul.f32.gmra.mxu0 %v430
    %v489 = vpop.f32.mrf.mxu0
    %v490 = vadd.f32 %v423, %v489
    %491 = vdwg.mxu0
    %492 = vmatpush.msra.mxu0 0.0
    %493 = vmatpush.msra.mxu0 0.0
    %494 = vmatpush.msra.mxu0 0.0
    %495 = vmatpush.msra.mxu0 0.0
    %496 = vmatpush.msra.mxu0 0.0
    %497 = vmatpush.msra.mxu0 0.0
    %498 = vmatpush.msra.mxu0 0.0
    %499 = vmatpush.msra.mxu0 0.0
    %500 = vmatpush.msra.mxu0 0.0
    %501 = vmatpush.msra.mxu0 0.0
    %502 = vmatpush.msra.mxu0 0.0
    %503 = vmatpush.msra.mxu0 0.0
    %504 = vmatpush.msra.mxu0 %v418
    %505 = vmatpush.msra.mxu0 %v414
    %506 = vmatpush.msra.mxu0 %v410
    %507 = vmatpush.msra.mxu0 %v406
    %508 = vmatmul.f32.gmra.mxu0 %v430
    %v509 = vpop.f32.mrf.mxu0
    %v510 = vadd.f32 %v424, %v509
    %511 = vdwg.mxu0
    %v516 = vrot.slane %v470, 7
    %v517 = vrot.slane %v490, 6
    %v518 = vrot.slane %v510, 5
    %vm519 = vcmask 1040384
    %v520 = vsel %vm519, %v450, %v516
    %vm521 = vcmask 1042434
    %v522 = vsel %vm521, %v517, %v518
    %vm523 = vcmask 1041408
    %v524 = vsel %vm523, %v520, %v522
    %v526 = vlaneseq
    %vm527 = vcmp.ge.s32.totalorder %v526, 0
    %vm528 = vcmp.lt.s32.totalorder %v526, 512
    %vm529 = vmand %vm527, %vm528
    %530 = vst.msk [vmem:[#allocation11] sm:$0xf] %vm529, %v524
    // Predicated region
    $region78: #{tpu_custom_call.1} parent=1 // pred_check
      _
    $region79: #{tpu_custom_call.1} parent=1 // pred_check_branch
      %532 = sbr.rel (0) target = $region81
    $region80: #{tpu_custom_call.1} parent=1 // pred_region
      %534 = vsyncadd [#allocation5], 0
      %s536 = sshll.u32 [#allocation11], 4
      %s537 = int_to_ptr.vmem [resolvable:$true] %s536
      %s538 = sshll.u32 %s15, 4
      %s539 = int_to_ptr.hbm [resolvable:$true] %s538
      %541 = dma.vmem_to_hbm [thread:$0]  %s537, 64, %s539, [#allocation5]
    $region81: #{tpu_custom_call.1} parent=1 // pred_fallthru
      _
    // Predicated region
    $region82: #{tpu_custom_call.1} parent=1 // pred_check
      _
    $region83: #{tpu_custom_call.1} parent=1 // pred_check_branch
      %543 = sbr.rel (0) target = $region85
    $region84: #{tpu_custom_call.1} parent=1 // pred_region
      %545 = dma.done [#allocation5], 64
    $region85: #{tpu_custom_call.1} parent=1 // pred_fallthru
      _
    %546 = vsyncpa [#allocation4], 1
    %547 = vsyncpa [#allocation7], 1
    %548 = vsyncpa [#allocation10], 1
    %549 = vsyncpa [#allocation5], 1

</llo_original>
